<compile_context>
chip_gen: v6e
topology: v6e:2x2x1
jax: 0.10.0
libtpu: 0.0.40
codegen_flags: <defaults>
</compile_context>

<pallas_src>
import jax
import jax.numpy as jnp
from jax.experimental import pallas as pl
from jax.experimental.pallas import tpu as pltpu

EPS = 1e-6
NEG_RATIO = 3.0
L1_SCALE = 10.0
BCE_SCALE = 5.0

LANES = 512      # lane-dense slab width (multiple of 128)
TR_MAX = 512     # max rows per tile (512x512 f32 tile -> ~13 MiB double-buffered)
ROW_ALIGN = 16   # keep row tiles 16-aligned (bf16 sublane packing)


def _round_up(a, b):
    return -(-a // b) * b


def _loss_kernel(binary_ref, gt_ref, mask_ref, thresh_ref, tmap_ref,
                 tmask_ref, tbin_ref, negloss_ref, part_ref):
    pred = binary_ref[...]
    gt = gt_ref[...].astype(jnp.float32)
    mask = mask_ref[...].astype(jnp.float32)

    gm = gt * mask
    # .byte() in torch truncates toward zero; inputs are non-negative -> floor.
    pos = jnp.floor(gm)
    neg = jnp.floor((1.0 - gt) * mask)

    # F.binary_cross_entropy(reduction='none'); torch clamps log terms at -100.
    log_p = jnp.maximum(jnp.log(pred), -100.0)
    log_1mp = jnp.maximum(jnp.log(1.0 - pred), -100.0)
    bce = -(gt * log_p + (1.0 - gt) * log_1mp)

    negloss_ref[...] = bce * neg

    th = thresh_ref[...]
    tmap = tmap_ref[...]
    tmask = tmask_ref[...].astype(jnp.float32)
    tb = tbin_ref[...]

    # Sublane-reduced (lane-wise) partial sums; the cross-lane collapse and the
    # cross-tile sum happen outside the kernel, keeping the grid carry-free so
    # the single grid axis can be marked "parallel" (megacore on v7x).
    def put(j, x):
        part_ref[pl.ds(j, 1), :] = jnp.sum(x, axis=0, keepdims=True)

    put(0, pos)                          # positive count
    put(1, neg)                          # full negative count
    put(2, bce * pos)                    # positive BCE sum
    put(3, jnp.abs(th - tmap) * tmask)   # masked L1 sum
    put(4, tmask)                        # thresh-mask sum
    put(5, tb * gm)                      # dice intersection
    put(6, tb * mask)                    # dice union term 1
    put(7, gm)                           # dice union term 2


def l1_balance_ce_loss(binary, gt, mask, thresh, thresh_binary,
                       thresh_map, thresh_mask):
    N, _, H, W = binary.shape
    E = N * H * W

    L = LANES
    rows_raw = max(-(-E // L), 1)
    rows_a = _round_up(rows_raw, ROW_ALIGN)
    grid = -(-rows_a // TR_MAX)
    TR = _round_up(-(-rows_a // grid), ROW_ALIGN)   # balance tiles, minimal pad
    rows = grid * TR
    total = rows * L

    def slab(x, dtype, pad_value=0.0):
        flat = jnp.asarray(x, jnp.float32).reshape(-1)
        flat = jnp.pad(flat, (0, total - E), constant_values=pad_value)
        return flat.reshape(rows, L).astype(dtype)

    # 0/1 indicator maps are exact in bf16 -> halve their HBM read traffic.
    b2 = slab(binary, jnp.float32, 0.5)      # pad pred away from 0/1
    g2 = slab(gt, jnp.bfloat16)
    m2 = slab(mask, jnp.bfloat16)
    th2 = slab(thresh, jnp.float32)
    tm2 = slab(thresh_map, jnp.float32)
    tk2 = slab(thresh_mask, jnp.bfloat16)
    tb2 = slab(thresh_binary, jnp.float32)

    tile_spec = pl.BlockSpec((TR, L), lambda i: (i, 0))
    part_spec = pl.BlockSpec((8, L), lambda i: (i, 0))

    negloss, parts = pl.pallas_call(
        _loss_kernel,
        out_shape=(jax.ShapeDtypeStruct((rows, L), jnp.float32),
                   jax.ShapeDtypeStruct((grid * 8, L), jnp.float32)),
        grid=(grid,),
        in_specs=[tile_spec] * 7,
        out_specs=(tile_spec, part_spec),
        compiler_params=pltpu.CompilerParams(
            dimension_semantics=("parallel",),
            vmem_limit_bytes=40 << 20),
    )(b2, g2, m2, th2, tm2, tk2, tb2)

    scal = parts.reshape(grid, 8, L).sum(axis=(0, 2))

    pos_count = jnp.floor(scal[0])
    neg_count_all = jnp.floor(scal[1])
    pos_loss_sum = scal[2]
    l1_sum = scal[3]
    mask_sum = scal[4]
    inter = scal[5]
    u1 = scal[6]
    u2 = scal[7]

    # negative_count = min(int(neg_sum), int(pos_count * negative_ratio))
    negative_count = jnp.minimum(neg_count_all, jnp.floor(pos_count * NEG_RATIO))

    # TODO(synk): torch.topk with a data-dependent k has no clean Pallas TPU
    # equivalent; the exact dynamic-k selection is a full jnp.sort here -- at
    # production sizes a histogram / threshold binary-search on the negloss map
    # would be cheaper than the sort.
    neg_flat = negloss.reshape(-1)
    sorted_neg = -jnp.sort(-neg_flat)                 # descending
    idx = jnp.arange(neg_flat.shape[0], dtype=jnp.int32)
    k = negative_count.astype(jnp.int32)
    neg_topk_sum = jnp.sum(jnp.where(idx < k, sorted_neg, 0.0))

    bce_loss = (pos_loss_sum + neg_topk_sum) / (pos_count + negative_count + EPS)

    safe_den = jnp.where(mask_sum == 0.0, 1.0, mask_sum)
    thresh_l1_loss = jnp.where(mask_sum == 0.0, 0.0, l1_sum / safe_den)

    thresh_dice_loss = 1.0 - 2.0 * inter / (u1 + u2 + EPS)

    total_loss = BCE_SCALE * bce_loss + L1_SCALE * thresh_l1_loss + thresh_dice_loss
    return dict(loss_bce=bce_loss,
                loss_thresh_l1=thresh_l1_loss,
                loss_thresh_dice=thresh_dice_loss,
                loss=total_loss)


def _reference(binary, gt, mask, thresh, thresh_binary, thresh_map, thresh_mask):
    """Pure-JAX reference mirroring the PyTorch semantics."""
    pred = binary[:, 0]
    g = gt[:, 0]
    pos = jnp.floor(g * mask)
    neg = jnp.floor((1.0 - g) * mask)
    pos_count = jnp.sum(pos)
    neg_count = jnp.minimum(jnp.sum(neg), jnp.floor(pos_count * NEG_RATIO))
    log_p = jnp.maximum(jnp.log(pred), -100.0)
    log_1mp = jnp.maximum(jnp.log(1.0 - pred), -100.0)
    bce = -(g * log_p + (1.0 - g) * log_1mp)
    pos_sum = jnp.sum(bce * pos)
    neg_flat = (bce * neg).reshape(-1)
    sorted_neg = -jnp.sort(-neg_flat)
    neg_sum = jnp.sum(jnp.where(
        jnp.arange(neg_flat.shape[0], dtype=jnp.int32) < neg_count.astype(jnp.int32),
        sorted_neg, 0.0))
    bce_loss = (pos_sum + neg_sum) / (pos_count + neg_count + EPS)

    msum = jnp.sum(thresh_mask)
    l1 = jnp.where(msum == 0.0, 0.0,
                   jnp.sum(jnp.abs(thresh[:, 0] - thresh_map) * thresh_mask)
                   / jnp.where(msum == 0.0, 1.0, msum))

    tb = thresh_binary[:, 0]
    inter = jnp.sum(tb * g * mask)
    union = jnp.sum(tb * mask) + jnp.sum(g * mask) + EPS
    dice = 1.0 - 2.0 * inter / union
    return BCE_SCALE * bce_loss + L1_SCALE * l1 + dice


if __name__ == "__main__":
    key = jax.random.PRNGKey(0)
    N, H, W = 2, 16, 16
    k1, k2, k3, k4, k5, k6, k7 = jax.random.split(key, 7)

    binary = jax.nn.sigmoid(jax.random.normal(k1, (N, 1, H, W), jnp.float32))
    gt = (jax.random.uniform(k2, (N, 1, H, W)) > 0.7).astype(jnp.float32)
    mask = (jax.random.uniform(k3, (N, H, W)) > 0.2).astype(jnp.float32)
    thresh = jax.nn.sigmoid(jax.random.normal(k4, (N, 1, H, W), jnp.float32))
    thresh_binary = jax.nn.sigmoid(jax.random.normal(k5, (N, 1, H, W), jnp.float32))
    thresh_map = jax.random.uniform(k6, (N, H, W), dtype=jnp.float32)
    thresh_mask = (jax.random.uniform(k7, (N, H, W)) > 0.3).astype(jnp.float32)

    out = l1_balance_ce_loss(binary, gt, mask, thresh, thresh_binary,
                             thresh_map, thresh_mask)
    jax.block_until_ready(out["loss"])

    ref = _reference(binary, gt, mask, thresh, thresh_binary,
                     thresh_map, thresh_mask)
    assert jnp.abs(out["loss"] - ref) < 1e-4, (out["loss"], ref)

    print("KERNEL_OK")
</pallas_src>

<mosaic_0001>
module attributes {stable_mosaic.version = 11 : i64} {
  func.func @_loss_kernel(%arg0: i32, %arg1: memref<16x512xf32, #tpu.memory_space<vmem>>, %arg2: memref<16x512xbf16, #tpu.memory_space<vmem>>, %arg3: memref<16x512xbf16, #tpu.memory_space<vmem>>, %arg4: memref<16x512xf32, #tpu.memory_space<vmem>>, %arg5: memref<16x512xf32, #tpu.memory_space<vmem>>, %arg6: memref<16x512xbf16, #tpu.memory_space<vmem>>, %arg7: memref<16x512xf32, #tpu.memory_space<vmem>>, %arg8: memref<16x512xf32, #tpu.memory_space<vmem>>, %arg9: memref<8x512xf32, #tpu.memory_space<vmem>>) attributes {dimension_semantics = [#tpu.dimension_semantics<parallel>], iteration_bounds = array<i64: 1>, scalar_prefetch = 0 : i64, scratch_operands = 0 : i64, tpu.core_type = #tpu.core_type<tc>, window_params = [{transform_indices = @transform_0, window_bounds = array<i64: 16, 512>}, {transform_indices = @transform_1, window_bounds = array<i64: 16, 512>}, {transform_indices = @transform_2, window_bounds = array<i64: 16, 512>}, {transform_indices = @transform_3, window_bounds = array<i64: 16, 512>}, {transform_indices = @transform_4, window_bounds = array<i64: 16, 512>}, {transform_indices = @transform_5, window_bounds = array<i64: 16, 512>}, {transform_indices = @transform_6, window_bounds = array<i64: 16, 512>}, {transform_indices = @transform_7, window_bounds = array<i64: 16, 512>}, {transform_indices = @transform_8, window_bounds = array<i64: 8, 512>}]} {
    %c0 = arith.constant 0 : index
    %c0_0 = arith.constant 0 : index
    %0 = vector.load %arg1[%c0, %c0_0] : memref<16x512xf32, #tpu.memory_space<vmem>>, vector<16x512xf32>
    %c0_1 = arith.constant 0 : index
    %c0_2 = arith.constant 0 : index
    %1 = vector.load %arg2[%c0_1, %c0_2] : memref<16x512xbf16, #tpu.memory_space<vmem>>, vector<16x512xbf16>
    %2 = arith.extf %1 : vector<16x512xbf16> to vector<16x512xf32>
    %c0_3 = arith.constant 0 : index
    %c0_4 = arith.constant 0 : index
    %3 = vector.load %arg3[%c0_3, %c0_4] : memref<16x512xbf16, #tpu.memory_space<vmem>>, vector<16x512xbf16>
    %4 = arith.extf %3 : vector<16x512xbf16> to vector<16x512xf32>
    %5 = arith.mulf %2, %4 : vector<16x512xf32>
    %6 = math.floor %5 : vector<16x512xf32>
    %cst = arith.constant 1.000000e+00 : f32
    %7 = vector.broadcast %cst : f32 to vector<16x512xf32>
    %8 = arith.subf %7, %2 : vector<16x512xf32>
    %9 = arith.mulf %8, %4 : vector<16x512xf32>
    %10 = math.floor %9 : vector<16x512xf32>
    %11 = math.log %0 : vector<16x512xf32>
    %cst_5 = arith.constant -1.000000e+02 : f32
    %12 = vector.broadcast %cst_5 : f32 to vector<16x512xf32>
    %13 = arith.maximumf %11, %12 : vector<16x512xf32>
    %cst_6 = arith.constant 1.000000e+00 : f32
    %14 = vector.broadcast %cst_6 : f32 to vector<16x512xf32>
    %15 = arith.subf %14, %0 : vector<16x512xf32>
    %16 = math.log %15 : vector<16x512xf32>
    %cst_7 = arith.constant -1.000000e+02 : f32
    %17 = vector.broadcast %cst_7 : f32 to vector<16x512xf32>
    %18 = arith.maximumf %16, %17 : vector<16x512xf32>
    %19 = arith.mulf %2, %13 : vector<16x512xf32>
    %cst_8 = arith.constant 1.000000e+00 : f32
    %20 = vector.broadcast %cst_8 : f32 to vector<16x512xf32>
    %21 = arith.subf %20, %2 : vector<16x512xf32>
    %22 = arith.mulf %21, %18 : vector<16x512xf32>
    %23 = arith.addf %19, %22 : vector<16x512xf32>
    %cst_9 = arith.constant 0.000000e+00 : f32
    %24 = vector.broadcast %cst_9 : f32 to vector<16x512xf32>
    %25 = arith.subf %24, %23 : vector<16x512xf32>
    %26 = arith.mulf %25, %10 : vector<16x512xf32>
    %c0_10 = arith.constant 0 : index
    %c0_11 = arith.constant 0 : index
    %27 = vector.load %arg8[%c0_10, %c0_11] : memref<16x512xf32, #tpu.memory_space<vmem>>, vector<16x512xf32>
    tpu.vector_store %arg8[%c0_10, %c0_11], %26 {strides = array<i32>} : memref<16x512xf32, #tpu.memory_space<vmem>>, vector<16x512xf32>,
    %c0_12 = arith.constant 0 : index
    %c0_13 = arith.constant 0 : index
    %28 = vector.load %arg4[%c0_12, %c0_13] : memref<16x512xf32, #tpu.memory_space<vmem>>, vector<16x512xf32>
    %c0_14 = arith.constant 0 : index
    %c0_15 = arith.constant 0 : index
    %29 = vector.load %arg5[%c0_14, %c0_15] : memref<16x512xf32, #tpu.memory_space<vmem>>, vector<16x512xf32>
    %c0_16 = arith.constant 0 : index
    %c0_17 = arith.constant 0 : index
    %30 = vector.load %arg6[%c0_16, %c0_17] : memref<16x512xbf16, #tpu.memory_space<vmem>>, vector<16x512xbf16>
    %31 = arith.extf %30 : vector<16x512xbf16> to vector<16x512xf32>
    %c0_18 = arith.constant 0 : index
    %c0_19 = arith.constant 0 : index
    %32 = vector.load %arg7[%c0_18, %c0_19] : memref<16x512xf32, #tpu.memory_space<vmem>>, vector<16x512xf32>
    %cst_20 = arith.constant dense<0.000000e+00> : vector<512xf32>
    %33 = vector.multi_reduction <add>, %6, %cst_20 [0] : vector<16x512xf32> to vector<512xf32>
    %34 = vector.shape_cast %33 : vector<512xf32> to vector<1x512xf32>
    %c0_21 = arith.constant 0 : index
    %c0_22 = arith.constant 0 : index
    %35 = vector.load %arg9[%c0_21, %c0_22] : memref<8x512xf32, #tpu.memory_space<vmem>>, vector<1x512xf32>
    tpu.vector_store %arg9[%c0_21, %c0_22], %34 {strides = array<i32>} : memref<8x512xf32, #tpu.memory_space<vmem>>, vector<1x512xf32>,
    %cst_23 = arith.constant dense<0.000000e+00> : vector<512xf32>
    %36 = vector.multi_reduction <add>, %10, %cst_23 [0] : vector<16x512xf32> to vector<512xf32>
    %37 = vector.shape_cast %36 : vector<512xf32> to vector<1x512xf32>
    %c1 = arith.constant 1 : index
    %c0_24 = arith.constant 0 : index
    %38 = vector.load %arg9[%c1, %c0_24] : memref<8x512xf32, #tpu.memory_space<vmem>>, vector<1x512xf32>
    tpu.vector_store %arg9[%c1, %c0_24], %37 {strides = array<i32>} : memref<8x512xf32, #tpu.memory_space<vmem>>, vector<1x512xf32>,
    %39 = arith.mulf %25, %6 : vector<16x512xf32>
    %cst_25 = arith.constant dense<0.000000e+00> : vector<512xf32>
    %40 = vector.multi_reduction <add>, %39, %cst_25 [0] : vector<16x512xf32> to vector<512xf32>
    %41 = vector.shape_cast %40 : vector<512xf32> to vector<1x512xf32>
    %c2 = arith.constant 2 : index
    %c0_26 = arith.constant 0 : index
    %42 = vector.load %arg9[%c2, %c0_26] : memref<8x512xf32, #tpu.memory_space<vmem>>, vector<1x512xf32>
    tpu.vector_store %arg9[%c2, %c0_26], %41 {strides = array<i32>} : memref<8x512xf32, #tpu.memory_space<vmem>>, vector<1x512xf32>,
    %43 = arith.subf %28, %29 : vector<16x512xf32>
    %44 = math.absf %43 : vector<16x512xf32>
    %45 = arith.mulf %44, %31 : vector<16x512xf32>
    %cst_27 = arith.constant dense<0.000000e+00> : vector<512xf32>
    %46 = vector.multi_reduction <add>, %45, %cst_27 [0] : vector<16x512xf32> to vector<512xf32>
    %47 = vector.shape_cast %46 : vector<512xf32> to vector<1x512xf32>
    %c3 = arith.constant 3 : index
    %c0_28 = arith.constant 0 : index
    %48 = vector.load %arg9[%c3, %c0_28] : memref<8x512xf32, #tpu.memory_space<vmem>>, vector<1x512xf32>
    tpu.vector_store %arg9[%c3, %c0_28], %47 {strides = array<i32>} : memref<8x512xf32, #tpu.memory_space<vmem>>, vector<1x512xf32>,
    %cst_29 = arith.constant dense<0.000000e+00> : vector<512xf32>
    %49 = vector.multi_reduction <add>, %31, %cst_29 [0] : vector<16x512xf32> to vector<512xf32>
    %50 = vector.shape_cast %49 : vector<512xf32> to vector<1x512xf32>
    %c4 = arith.constant 4 : index
    %c0_30 = arith.constant 0 : index
    %51 = vector.load %arg9[%c4, %c0_30] : memref<8x512xf32, #tpu.memory_space<vmem>>, vector<1x512xf32>
    tpu.vector_store %arg9[%c4, %c0_30], %50 {strides = array<i32>} : memref<8x512xf32, #tpu.memory_space<vmem>>, vector<1x512xf32>,
    %52 = arith.mulf %32, %5 : vector<16x512xf32>
    %cst_31 = arith.constant dense<0.000000e+00> : vector<512xf32>
    %53 = vector.multi_reduction <add>, %52, %cst_31 [0] : vector<16x512xf32> to vector<512xf32>
    %54 = vector.shape_cast %53 : vector<512xf32> to vector<1x512xf32>
    %c5 = arith.constant 5 : index
    %c0_32 = arith.constant 0 : index
    %55 = vector.load %arg9[%c5, %c0_32] : memref<8x512xf32, #tpu.memory_space<vmem>>, vector<1x512xf32>
    tpu.vector_store %arg9[%c5, %c0_32], %54 {strides = array<i32>} : memref<8x512xf32, #tpu.memory_space<vmem>>, vector<1x512xf32>,
    %56 = arith.mulf %32, %4 : vector<16x512xf32>
    %cst_33 = arith.constant dense<0.000000e+00> : vector<512xf32>
    %57 = vector.multi_reduction <add>, %56, %cst_33 [0] : vector<16x512xf32> to vector<512xf32>
    %58 = vector.shape_cast %57 : vector<512xf32> to vector<1x512xf32>
    %c6 = arith.constant 6 : index
    %c0_34 = arith.constant 0 : index
    %59 = vector.load %arg9[%c6, %c0_34] : memref<8x512xf32, #tpu.memory_space<vmem>>, vector<1x512xf32>
    tpu.vector_store %arg9[%c6, %c0_34], %58 {strides = array<i32>} : memref<8x512xf32, #tpu.memory_space<vmem>>, vector<1x512xf32>,
    %cst_35 = arith.constant dense<0.000000e+00> : vector<512xf32>
    %60 = vector.multi_reduction <add>, %5, %cst_35 [0] : vector<16x512xf32> to vector<512xf32>
    %61 = vector.shape_cast %60 : vector<512xf32> to vector<1x512xf32>
    %c7 = arith.constant 7 : index
    %c0_36 = arith.constant 0 : index
    %62 = vector.load %arg9[%c7, %c0_36] : memref<8x512xf32, #tpu.memory_space<vmem>>, vector<1x512xf32>
    tpu.vector_store %arg9[%c7, %c0_36], %61 {strides = array<i32>} : memref<8x512xf32, #tpu.memory_space<vmem>>, vector<1x512xf32>,
    return
  }
  func.func @transform_0(%arg0: i32) -> (i32, i32) {
    %c0_i32 = arith.constant 0 : i32
    %c0_i32_0 = arith.constant 0 : i32
    return %arg0, %c0_i32 : i32, i32
  }
  func.func @transform_1(%arg0: i32) -> (i32, i32) {
    %c0_i32 = arith.constant 0 : i32
    %c0_i32_0 = arith.constant 0 : i32
    return %arg0, %c0_i32 : i32, i32
  }
  func.func @transform_2(%arg0: i32) -> (i32, i32) {
    %c0_i32 = arith.constant 0 : i32
    %c0_i32_0 = arith.constant 0 : i32
    return %arg0, %c0_i32 : i32, i32
  }
  func.func @transform_3(%arg0: i32) -> (i32, i32) {
    %c0_i32 = arith.constant 0 : i32
    %c0_i32_0 = arith.constant 0 : i32
    return %arg0, %c0_i32 : i32, i32
  }
  func.func @transform_4(%arg0: i32) -> (i32, i32) {
    %c0_i32 = arith.constant 0 : i32
    %c0_i32_0 = arith.constant 0 : i32
    return %arg0, %c0_i32 : i32, i32
  }
  func.func @transform_5(%arg0: i32) -> (i32, i32) {
    %c0_i32 = arith.constant 0 : i32
    %c0_i32_0 = arith.constant 0 : i32
    return %arg0, %c0_i32 : i32, i32
  }
  func.func @transform_6(%arg0: i32) -> (i32, i32) {
    %c0_i32 = arith.constant 0 : i32
    %c0_i32_0 = arith.constant 0 : i32
    return %arg0, %c0_i32 : i32, i32
  }
  func.func @transform_7(%arg0: i32) -> (i32, i32) {
    %c0_i32 = arith.constant 0 : i32
    %c0_i32_0 = arith.constant 0 : i32
    return %arg0, %c0_i32 : i32, i32
  }
  func.func @transform_8(%arg0: i32) -> (i32, i32) {
    %c0_i32 = arith.constant 0 : i32
    %c0_i32_0 = arith.constant 0 : i32
    return %arg0, %c0_i32 : i32, i32
  }
}

</mosaic_0001>

<llo_original>
// kernel: tpu_custom_call.1
$region0: #{tpu_custom_call.1}
  #allocation0 [shape = 'u32[]', space=smem, size = 0x4, offset = 0x4, fixed_abs, tag = 'smem constant byte address 0x4 - core index']
  #allocation1 [shape = 'u32[144,128]{1,0:T(1,128)}', space=vmem, size = 0x12000, scoped, tag = 'internal scratch']
  %s0 = inlined_call_operand.hbm [shape: f32[16,512], index: 0, kind: input, shape index: {}]
  %s1 = inlined_call_operand.hbm [shape: bf16[16,512], index: 1, kind: input, shape index: {}]
  %s2 = inlined_call_operand.hbm [shape: bf16[16,512], index: 2, kind: input, shape index: {}]
  %s3 = inlined_call_operand.hbm [shape: f32[16,512], index: 3, kind: input, shape index: {}]
  %s4 = inlined_call_operand.hbm [shape: f32[16,512], index: 4, kind: input, shape index: {}]
  %s5 = inlined_call_operand.hbm [shape: bf16[16,512], index: 5, kind: input, shape index: {}]
  %s6 = inlined_call_operand.hbm [shape: f32[16,512], index: 6, kind: input, shape index: {}]
  %s7 = inlined_call_operand.hbm [shape: f32[16,512], index: 7, kind: output, shape index: {0}]
  %s8 = inlined_call_operand.hbm [shape: f32[8,512], index: 8, kind: output, shape index: {1}]
  %9 = xla_tuple %s7, %s8
  %s10 = sld [smem:[#allocation0]]
  $region74: #{tpu_custom_call.1} parent=0
    _
  %s12 = ssub.s32 1, %s10
  %s13 = scalar_select 0, %s12, %s10
  $region1: #{tpu_custom_call.1} parent=0
    #allocation2 [shape = 'u8[32768]{0}', space=vmem, size = 0x8000, scoped, tag = 'input window, operand 0, single buffered']
    #allocation3 [shape = 's32[1]{0}', space=sflag, size = 0x4, scoped, tag = 'scoped memory for tpu_custom_call.1']
    #allocation4 [shape = 's32[1]{0}', space=sflag, size = 0x4, scoped, tag = 'scoped memory for tpu_custom_call.1']
    #allocation5 [shape = 'u8[16384]{0}', space=vmem, size = 0x4000, scoped, tag = 'input window, operand 1, single buffered']
    #allocation6 [shape = 's32[1]{0}', space=sflag, size = 0x4, scoped, tag = 'scoped memory for tpu_custom_call.1']
    #allocation7 [shape = 'u8[16384]{0}', space=vmem, size = 0x4000, scoped, tag = 'input window, operand 2, single buffered']
    #allocation8 [shape = 'u8[32768]{0}', space=vmem, size = 0x8000, scoped, tag = 'input window, operand 3, single buffered']
    #allocation9 [shape = 's32[1]{0}', space=sflag, size = 0x4, scoped, tag = 'scoped memory for tpu_custom_call.1']
    #allocation10 [shape = 'u8[32768]{0}', space=vmem, size = 0x8000, scoped, tag = 'input window, operand 4, single buffered']
    #allocation11 [shape = 'u8[16384]{0}', space=vmem, size = 0x4000, scoped, tag = 'input window, operand 5, single buffered']
    #allocation12 [shape = 's32[1]{0}', space=sflag, size = 0x4, scoped, tag = 'scoped memory for tpu_custom_call.1']
    #allocation13 [shape = 'u8[32768]{0}', space=vmem, size = 0x8000, scoped, tag = 'input window, operand 6, single buffered']
    #allocation14 [shape = 'u8[32768]{0}', space=vmem, size = 0x8000, scoped, tag = 'output window, operand 0, single buffered']
    #allocation15 [shape = 'u8[16384]{0}', space=vmem, size = 0x4000, scoped, tag = 'output window, operand 1, single buffered']
    #allocation16 [shape = 's32[1]{0}', space=sflag, size = 0x4, scoped, tag = 'scoped memory for tpu_custom_call.1']
    %14 = vsyncpa [#allocation3], 0
    %15 = vsyncpa [#allocation6], 0
    %16 = vsyncpa [#allocation9], 0
    %17 = vsyncpa [#allocation12], 0
    %18 = vsyncpa [#allocation4], 0
    %19 = vsyncpa [#allocation16], 0
    // Predicated region
    $region2: #{tpu_custom_call.1} parent=1 // pred_check
      _
    $region3: #{tpu_custom_call.1} parent=1 // pred_check_branch
      %21 = sbr.rel (0) target = $region5
    $region4: #{tpu_custom_call.1} parent=1 // pred_region
      %s23 = ssub.s32 1024, 1024
      %24 = vsyncadd [#allocation3], %s23
      %s25 = sshll.u32 [#allocation2], 4
      %s26 = int_to_ptr.vmem [resolvable:$true] %s25
      %31 = dma.hbm_to_vmem [thread:$0]  %s0, 1024, %s26, [#allocation3], 512, 512, 32
    $region5: #{tpu_custom_call.1} parent=1 // pred_fallthru
      _
    // Predicated region
    $region6: #{tpu_custom_call.1} parent=1 // pred_check
      _
    $region7: #{tpu_custom_call.1} parent=1 // pred_check_branch
      %33 = sbr.rel (0) target = $region9
    $region8: #{tpu_custom_call.1} parent=1 // pred_region
      %s35 = ssub.s32 512, 512
      %36 = vsyncadd [#allocation6], %s35
      %s37 = sshll.u32 [#allocation5], 4
      %s38 = int_to_ptr.vmem [resolvable:$true] %s37
      %43 = dma.hbm_to_vmem [thread:$0]  %s1, 512, %s38, [#allocation6], 256, 256, 16
    $region9: #{tpu_custom_call.1} parent=1 // pred_fallthru
      _
    // Predicated region
    $region10: #{tpu_custom_call.1} parent=1 // pred_check
      _
    $region11: #{tpu_custom_call.1} parent=1 // pred_check_branch
      %45 = sbr.rel (0) target = $region13
    $region12: #{tpu_custom_call.1} parent=1 // pred_region
      %s47 = ssub.s32 512, 512
      %48 = vsyncadd [#allocation6], %s47
      %s49 = sshll.u32 [#allocation7], 4
      %s50 = int_to_ptr.vmem [resolvable:$true] %s49
      %55 = dma.hbm_to_vmem [thread:$0]  %s2, 512, %s50, [#allocation6], 256, 256, 16
    $region13: #{tpu_custom_call.1} parent=1 // pred_fallthru
      _
    // Predicated region
    $region14: #{tpu_custom_call.1} parent=1 // pred_check
      _
    $region15: #{tpu_custom_call.1} parent=1 // pred_check_branch
      %57 = sbr.rel (0) target = $region17
    $region16: #{tpu_custom_call.1} parent=1 // pred_region
      %s59 = ssub.s32 1024, 1024
      %60 = vsyncadd [#allocation9], %s59
      %s61 = sshll.u32 [#allocation8], 4
      %s62 = int_to_ptr.vmem [resolvable:$true] %s61
      %67 = dma.hbm_to_vmem [thread:$0]  %s3, 1024, %s62, [#allocation9], 512, 512, 32
    $region17: #{tpu_custom_call.1} parent=1 // pred_fallthru
      _
    // Predicated region
    $region18: #{tpu_custom_call.1} parent=1 // pred_check
      _
    $region19: #{tpu_custom_call.1} parent=1 // pred_check_branch
      %69 = sbr.rel (0) target = $region21
    $region20: #{tpu_custom_call.1} parent=1 // pred_region
      %s71 = ssub.s32 1024, 1024
      %72 = vsyncadd [#allocation9], %s71
      %s73 = sshll.u32 [#allocation10], 4
      %s74 = int_to_ptr.vmem [resolvable:$true] %s73
      %79 = dma.hbm_to_vmem [thread:$0]  %s4, 1024, %s74, [#allocation9], 512, 512, 32
    $region21: #{tpu_custom_call.1} parent=1 // pred_fallthru
      _
    // Predicated region
    $region22: #{tpu_custom_call.1} parent=1 // pred_check
      _
    $region23: #{tpu_custom_call.1} parent=1 // pred_check_branch
      %81 = sbr.rel (0) target = $region25
    $region24: #{tpu_custom_call.1} parent=1 // pred_region
      %s83 = ssub.s32 512, 512
      %84 = vsyncadd [#allocation12], %s83
      %s85 = sshll.u32 [#allocation11], 4
      %s86 = int_to_ptr.vmem [resolvable:$true] %s85
      %91 = dma.hbm_to_vmem [thread:$0]  %s5, 512, %s86, [#allocation12], 256, 256, 16
    $region25: #{tpu_custom_call.1} parent=1 // pred_fallthru
      _
    // Predicated region
    $region26: #{tpu_custom_call.1} parent=1 // pred_check
      _
    $region27: #{tpu_custom_call.1} parent=1 // pred_check_branch
      %93 = sbr.rel (0) target = $region29
    $region28: #{tpu_custom_call.1} parent=1 // pred_region
      %s95 = ssub.s32 1024, 1024
      %96 = vsyncadd [#allocation12], %s95
      %s97 = sshll.u32 [#allocation13], 4
      %s98 = int_to_ptr.vmem [resolvable:$true] %s97
      %103 = dma.hbm_to_vmem [thread:$0]  %s6, 1024, %s98, [#allocation12], 512, 512, 32
    $region29: #{tpu_custom_call.1} parent=1 // pred_fallthru
      _
    // Predicated region
    $region30: #{tpu_custom_call.1} parent=1 // pred_check
      _
    $region31: #{tpu_custom_call.1} parent=1 // pred_check_branch
      %105 = sbr.rel (0) target = $region33
    $region32: #{tpu_custom_call.1} parent=1 // pred_region
      %106 = dma.done [#allocation3], 1024
    $region33: #{tpu_custom_call.1} parent=1 // pred_fallthru
      _
    // Predicated region
    $region34: #{tpu_custom_call.1} parent=1 // pred_check
      _
    $region35: #{tpu_custom_call.1} parent=1 // pred_check_branch
      %108 = sbr.rel (0) target = $region37
    $region36: #{tpu_custom_call.1} parent=1 // pred_region
      %109 = dma.done [#allocation6], 512
    $region37: #{tpu_custom_call.1} parent=1 // pred_fallthru
      _
    // Predicated region
    $region38: #{tpu_custom_call.1} parent=1 // pred_check
      _
    $region39: #{tpu_custom_call.1} parent=1 // pred_check_branch
      %111 = sbr.rel (0) target = $region41
    $region40: #{tpu_custom_call.1} parent=1 // pred_region
      %112 = dma.done [#allocation6], 512
    $region41: #{tpu_custom_call.1} parent=1 // pred_fallthru
      _
    // Predicated region
    $region42: #{tpu_custom_call.1} parent=1 // pred_check
      _
    $region43: #{tpu_custom_call.1} parent=1 // pred_check_branch
      %114 = sbr.rel (0) target = $region45
    $region44: #{tpu_custom_call.1} parent=1 // pred_region
      %115 = dma.done [#allocation9], 1024
    $region45: #{tpu_custom_call.1} parent=1 // pred_fallthru
      _
    // Predicated region
    $region46: #{tpu_custom_call.1} parent=1 // pred_check
      _
    $region47: #{tpu_custom_call.1} parent=1 // pred_check_branch
      %117 = sbr.rel (0) target = $region49
    $region48: #{tpu_custom_call.1} parent=1 // pred_region
      %118 = dma.done [#allocation9], 1024
    $region49: #{tpu_custom_call.1} parent=1 // pred_fallthru
      _
    // Predicated region
    $region50: #{tpu_custom_call.1} parent=1 // pred_check
      _
    $region51: #{tpu_custom_call.1} parent=1 // pred_check_branch
      %120 = sbr.rel (0) target = $region53
    $region52: #{tpu_custom_call.1} parent=1 // pred_region
      %121 = dma.done [#allocation12], 512
    $region53: #{tpu_custom_call.1} parent=1 // pred_fallthru
      _
    // Predicated region
    $region54: #{tpu_custom_call.1} parent=1 // pred_check
      _
    $region55: #{tpu_custom_call.1} parent=1 // pred_check_branch
      %123 = sbr.rel (0) target = $region57
    $region56: #{tpu_custom_call.1} parent=1 // pred_region
      %124 = dma.done [#allocation12], 1024
    $region57: #{tpu_custom_call.1} parent=1 // pred_fallthru
      _
    %v125 = vld [vmem:[#allocation2] sm:$0xff]
    %v126 = vld [vmem:[#allocation2 + $0x8] sm:$0xff]
    %v127 = vld [vmem:[#allocation2 + $0x10] sm:$0xff]
    %v128 = vld [vmem:[#allocation2 + $0x18] sm:$0xff]
    %v129 = vld [vmem:[#allocation2 + $0x20] sm:$0xff]
    %v130 = vld [vmem:[#allocation2 + $0x28] sm:$0xff]
    %v131 = vld [vmem:[#allocation2 + $0x30] sm:$0xff]
    %v132 = vld [vmem:[#allocation2 + $0x38] sm:$0xff]
    %v133 = vld [vmem:[#allocation5] sm:$0xff]
    %v134 = vld [vmem:[#allocation5 + $0x8] sm:$0xff]
    %v135 = vld [vmem:[#allocation5 + $0x10] sm:$0xff]
    %v136 = vld [vmem:[#allocation5 + $0x18] sm:$0xff]
    %v137 = vunpack.c.l.bf16 %v133
    %v138 = vunpack.c.h.bf16 %v133
    %v139 = vunpack.c.l.bf16 %v134
    %v140 = vunpack.c.h.bf16 %v134
    %v141 = vunpack.c.l.bf16 %v135
    %v142 = vunpack.c.h.bf16 %v135
    %v143 = vunpack.c.l.bf16 %v136
    %v144 = vunpack.c.h.bf16 %v136
    %v145 = vld [vmem:[#allocation7] sm:$0xff]
    %v146 = vld [vmem:[#allocation7 + $0x8] sm:$0xff]
    %v147 = vld [vmem:[#allocation7 + $0x10] sm:$0xff]
    %v148 = vld [vmem:[#allocation7 + $0x18] sm:$0xff]
    %v149 = vunpack.c.l.bf16 %v145
    %v150 = vunpack.c.h.bf16 %v145
    %v151 = vunpack.c.l.bf16 %v146
    %v152 = vunpack.c.h.bf16 %v146
    %v153 = vunpack.c.l.bf16 %v147
    %v154 = vunpack.c.h.bf16 %v147
    %v155 = vunpack.c.l.bf16 %v148
    %v156 = vunpack.c.h.bf16 %v148
    %v157 = vmul.f32 %v137, %v149
    %v158 = vmul.f32 %v138, %v150
    %v159 = vmul.f32 %v139, %v151
    %v160 = vmul.f32 %v140, %v152
    %v161 = vmul.f32 %v141, %v153
    %v162 = vmul.f32 %v142, %v154
    %v163 = vmul.f32 %v143, %v155
    %v164 = vmul.f32 %v144, %v156
    %v165 = vfloor.f32 %v157
    %v166 = vfloor.f32 %v158
    %v167 = vfloor.f32 %v159
    %v168 = vfloor.f32 %v160
    %v169 = vfloor.f32 %v161
    %v170 = vfloor.f32 %v162
    %v171 = vfloor.f32 %v163
    %v172 = vfloor.f32 %v164
    %v173 = vsub.f32 1.0, %v137
    %v174 = vsub.f32 1.0, %v138
    %v175 = vsub.f32 1.0, %v139
    %v176 = vsub.f32 1.0, %v140
    %v177 = vsub.f32 1.0, %v141
    %v178 = vsub.f32 1.0, %v142
    %v179 = vsub.f32 1.0, %v143
    %v180 = vsub.f32 1.0, %v144
    %v181 = vmul.f32 %v173, %v149
    %v182 = vmul.f32 %v174, %v150
    %v183 = vmul.f32 %v175, %v151
    %v184 = vmul.f32 %v176, %v152
    %v185 = vmul.f32 %v177, %v153
    %v186 = vmul.f32 %v178, %v154
    %v187 = vmul.f32 %v179, %v155
    %v188 = vmul.f32 %v180, %v156
    %v189 = vfloor.f32 %v181
    %v190 = vfloor.f32 %v182
    %v191 = vfloor.f32 %v183
    %v192 = vfloor.f32 %v184
    %v193 = vfloor.f32 %v185
    %v194 = vfloor.f32 %v186
    %v195 = vfloor.f32 %v187
    %v196 = vfloor.f32 %v188
    %v197 = vlog2.pop %v125
    %v198 = vmul.f32 %v197, 0.6931472
    %v199 = vlog2.pop %v126
    %v200 = vmul.f32 %v199, 0.6931472
    %v201 = vlog2.pop %v127
    %v202 = vmul.f32 %v201, 0.6931472
    %v203 = vlog2.pop %v128
    %v204 = vmul.f32 %v203, 0.6931472
    %v205 = vlog2.pop %v129
    %v206 = vmul.f32 %v205, 0.6931472
    %v207 = vlog2.pop %v130
    %v208 = vmul.f32 %v207, 0.6931472
    %v209 = vlog2.pop %v131
    %v210 = vmul.f32 %v209, 0.6931472
    %v211 = vlog2.pop %v132
    %v212 = vmul.f32 %v211, 0.6931472
    %v213 = vmax.f32 %v198, -100.0
    %v214 = vmax.f32 %v200, -100.0
    %v215 = vmax.f32 %v202, -100.0
    %v216 = vmax.f32 %v204, -100.0
    %v217 = vmax.f32 %v206, -100.0
    %v218 = vmax.f32 %v208, -100.0
    %v219 = vmax.f32 %v210, -100.0
    %v220 = vmax.f32 %v212, -100.0
    %v221 = vsub.f32 1.0, %v125
    %v222 = vsub.f32 1.0, %v126
    %v223 = vsub.f32 1.0, %v127
    %v224 = vsub.f32 1.0, %v128
    %v225 = vsub.f32 1.0, %v129
    %v226 = vsub.f32 1.0, %v130
    %v227 = vsub.f32 1.0, %v131
    %v228 = vsub.f32 1.0, %v132
    %v229 = vlog2.pop %v221
    %v230 = vmul.f32 %v229, 0.6931472
    %v231 = vlog2.pop %v222
    %v232 = vmul.f32 %v231, 0.6931472
    %v233 = vlog2.pop %v223
    %v234 = vmul.f32 %v233, 0.6931472
    %v235 = vlog2.pop %v224
    %v236 = vmul.f32 %v235, 0.6931472
    %v237 = vlog2.pop %v225
    %v238 = vmul.f32 %v237, 0.6931472
    %v239 = vlog2.pop %v226
    %v240 = vmul.f32 %v239, 0.6931472
    %v241 = vlog2.pop %v227
    %v242 = vmul.f32 %v241, 0.6931472
    %v243 = vlog2.pop %v228
    %v244 = vmul.f32 %v243, 0.6931472
    %v245 = vmax.f32 %v230, -100.0
    %v246 = vmax.f32 %v232, -100.0
    %v247 = vmax.f32 %v234, -100.0
    %v248 = vmax.f32 %v236, -100.0
    %v249 = vmax.f32 %v238, -100.0
    %v250 = vmax.f32 %v240, -100.0
    %v251 = vmax.f32 %v242, -100.0
    %v252 = vmax.f32 %v244, -100.0
    %v253 = vmul.f32 %v137, %v213
    %v254 = vmul.f32 %v138, %v214
    %v255 = vmul.f32 %v139, %v215
    %v256 = vmul.f32 %v140, %v216
    %v257 = vmul.f32 %v141, %v217
    %v258 = vmul.f32 %v142, %v218
    %v259 = vmul.f32 %v143, %v219
    %v260 = vmul.f32 %v144, %v220
    %v261 = vmul.f32 %v173, %v245
    %v262 = vmul.f32 %v174, %v246
    %v263 = vmul.f32 %v175, %v247
    %v264 = vmul.f32 %v176, %v248
    %v265 = vmul.f32 %v177, %v249
    %v266 = vmul.f32 %v178, %v250
    %v267 = vmul.f32 %v179, %v251
    %v268 = vmul.f32 %v180, %v252
    %v269 = vadd.f32 %v253, %v261
    %v270 = vadd.f32 %v254, %v262
    %v271 = vadd.f32 %v255, %v263
    %v272 = vadd.f32 %v256, %v264
    %v273 = vadd.f32 %v257, %v265
    %v274 = vadd.f32 %v258, %v266
    %v275 = vadd.f32 %v259, %v267
    %v276 = vadd.f32 %v260, %v268
    %v277 = vsub.f32 0.0, %v269
    %v278 = vsub.f32 0.0, %v270
    %v279 = vsub.f32 0.0, %v271
    %v280 = vsub.f32 0.0, %v272
    %v281 = vsub.f32 0.0, %v273
    %v282 = vsub.f32 0.0, %v274
    %v283 = vsub.f32 0.0, %v275
    %v284 = vsub.f32 0.0, %v276
    %v285 = vmul.f32 %v277, %v189
    %v286 = vmul.f32 %v278, %v190
    %v287 = vmul.f32 %v279, %v191
    %v288 = vmul.f32 %v280, %v192
    %v289 = vmul.f32 %v281, %v193
    %v290 = vmul.f32 %v282, %v194
    %v291 = vmul.f32 %v283, %v195
    %v292 = vmul.f32 %v284, %v196
    %293 = vst [vmem:[#allocation14] sm:$0xff] %v285
    %294 = vst [vmem:[#allocation14 + $0x8] sm:$0xff] %v286
    %295 = vst [vmem:[#allocation14 + $0x10] sm:$0xff] %v287
    %296 = vst [vmem:[#allocation14 + $0x18] sm:$0xff] %v288
    %297 = vst [vmem:[#allocation14 + $0x20] sm:$0xff] %v289
    %298 = vst [vmem:[#allocation14 + $0x28] sm:$0xff] %v290
    %299 = vst [vmem:[#allocation14 + $0x30] sm:$0xff] %v291
    %300 = vst [vmem:[#allocation14 + $0x38] sm:$0xff] %v292
    %v301 = vld [vmem:[#allocation8] sm:$0xff]
    %v302 = vld [vmem:[#allocation8 + $0x8] sm:$0xff]
    %v303 = vld [vmem:[#allocation8 + $0x10] sm:$0xff]
    %v304 = vld [vmem:[#allocation8 + $0x18] sm:$0xff]
    %v305 = vld [vmem:[#allocation8 + $0x20] sm:$0xff]
    %v306 = vld [vmem:[#allocation8 + $0x28] sm:$0xff]
    %v307 = vld [vmem:[#allocation8 + $0x30] sm:$0xff]
    %v308 = vld [vmem:[#allocation8 + $0x38] sm:$0xff]
    %v309 = vld [vmem:[#allocation10] sm:$0xff]
    %v310 = vld [vmem:[#allocation10 + $0x8] sm:$0xff]
    %v311 = vld [vmem:[#allocation10 + $0x10] sm:$0xff]
    %v312 = vld [vmem:[#allocation10 + $0x18] sm:$0xff]
    %v313 = vld [vmem:[#allocation10 + $0x20] sm:$0xff]
    %v314 = vld [vmem:[#allocation10 + $0x28] sm:$0xff]
    %v315 = vld [vmem:[#allocation10 + $0x30] sm:$0xff]
    %v316 = vld [vmem:[#allocation10 + $0x38] sm:$0xff]
    %v317 = vld [vmem:[#allocation11] sm:$0xff]
    %v318 = vld [vmem:[#allocation11 + $0x8] sm:$0xff]
    %v319 = vld [vmem:[#allocation11 + $0x10] sm:$0xff]
    %v320 = vld [vmem:[#allocation11 + $0x18] sm:$0xff]
    %v321 = vunpack.c.l.bf16 %v317
    %v322 = vunpack.c.h.bf16 %v317
    %v323 = vunpack.c.l.bf16 %v318
    %v324 = vunpack.c.h.bf16 %v318
    %v325 = vunpack.c.l.bf16 %v319
    %v326 = vunpack.c.h.bf16 %v319
    %v327 = vunpack.c.l.bf16 %v320
    %v328 = vunpack.c.h.bf16 %v320
    %v329 = vld [vmem:[#allocation13] sm:$0xff]
    %v330 = vld [vmem:[#allocation13 + $0x8] sm:$0xff]
    %v331 = vld [vmem:[#allocation13 + $0x10] sm:$0xff]
    %v332 = vld [vmem:[#allocation13 + $0x18] sm:$0xff]
    %v333 = vld [vmem:[#allocation13 + $0x20] sm:$0xff]
    %v334 = vld [vmem:[#allocation13 + $0x28] sm:$0xff]
    %v335 = vld [vmem:[#allocation13 + $0x30] sm:$0xff]
    %v336 = vld [vmem:[#allocation13 + $0x38] sm:$0xff]
    %v337 = vadd.f32 %v165, %v169
    %v338 = vrot.slane %v337, 4
    %v339 = vadd.f32 %v337, %v338
    %v340 = vrot.slane %v339, 2
    %v341 = vadd.f32 %v339, %v340
    %v342 = vrot.slane %v341, 1
    %v343 = vadd.f32 %v341, %v342
    %v344 = vadd.f32 %v166, %v170
    %v345 = vrot.slane %v344, 4
    %v346 = vadd.f32 %v344, %v345
    %v347 = vrot.slane %v346, 2
    %v348 = vadd.f32 %v346, %v347
    %v349 = vrot.slane %v348, 1
    %v350 = vadd.f32 %v348, %v349
    %v351 = vadd.f32 %v167, %v171
    %v352 = vrot.slane %v351, 4
    %v353 = vadd.f32 %v351, %v352
    %v354 = vrot.slane %v353, 2
    %v355 = vadd.f32 %v353, %v354
    %v356 = vrot.slane %v355, 1
    %v357 = vadd.f32 %v355, %v356
    %v358 = vadd.f32 %v168, %v172
    %v359 = vrot.slane %v358, 4
    %v360 = vadd.f32 %v358, %v359
    %v361 = vrot.slane %v360, 2
    %v362 = vadd.f32 %v360, %v361
    %v363 = vrot.slane %v362, 1
    %v364 = vadd.f32 %v362, %v363
    %v369 = vcombine.low %v343, %v350
    %v370 = vcombine.low %v357, %v364
    %v372 = vunpack.c.l.s4 1966171168
    %v373 = vunpack.c.0.s8 %v372
    %v374 = vlaneseq
    %v375 = vshrl.u32 %v374, 7
    %v376 = vsub.s32 %v373, %v375
    %v377 = vrot.slane %v369, %v376
    %v379 = vunpack.c.l.s4 1966171168
    %v380 = vunpack.c.0.s8 %v379
    %v381 = vlaneseq
    %v382 = vshrl.u32 %v381, 7
    %v383 = vsub.s32 %v380, %v382
    %v384 = vrot.slane %v370, %v383
    %v385 = vcombine.low %v377, %v384
    %v387 = vunpack.c.l.s4 1966171168
    %v388 = vunpack.c.0.s8 %v387
    %v389 = vlaneseq
    %v390 = vshrl.u32 %v389, 7
    %v391 = vsub.s32 %v388, %v390
    %v392 = vrot.slane %v385, %v391
    %v394 = vlaneseq
    %vm395 = vcmp.ge.s32.totalorder %v394, 0
    %vm396 = vcmp.lt.s32.totalorder %v394, 512
    %vm397 = vmand %vm395, %vm396
    %398 = vst.msk [vmem:[#allocation15] ss:$8 sm:$0xf] %vm397, %v392
    %399 = vst.msk [vmem:[#allocation15] ss:$8 sm:$0x0] %vm397, %v392
    %v400 = vadd.f32 %v189, %v193
    %v401 = vrot.slane %v400, 4
    %v402 = vadd.f32 %v400, %v401
    %v403 = vrot.slane %v402, 2
    %v404 = vadd.f32 %v402, %v403
    %v405 = vrot.slane %v404, 1
    %v406 = vadd.f32 %v404, %v405
    %v407 = vadd.f32 %v190, %v194
    %v408 = vrot.slane %v407, 4
    %v409 = vadd.f32 %v407, %v408
    %v410 = vrot.slane %v409, 2
    %v411 = vadd.f32 %v409, %v410
    %v412 = vrot.slane %v411, 1
    %v413 = vadd.f32 %v411, %v412
    %v414 = vadd.f32 %v191, %v195
    %v415 = vrot.slane %v414, 4
    %v416 = vadd.f32 %v414, %v415
    %v417 = vrot.slane %v416, 2
    %v418 = vadd.f32 %v416, %v417
    %v419 = vrot.slane %v418, 1
    %v420 = vadd.f32 %v418, %v419
    %v421 = vadd.f32 %v192, %v196
    %v422 = vrot.slane %v421, 4
    %v423 = vadd.f32 %v421, %v422
    %v424 = vrot.slane %v423, 2
    %v425 = vadd.f32 %v423, %v424
    %v426 = vrot.slane %v425, 1
    %v427 = vadd.f32 %v425, %v426
    %v432 = vcombine.low %v406, %v413
    %v433 = vcombine.low %v420, %v427
    %v435 = vunpack.c.l.s4 1966171168
    %v436 = vunpack.c.0.s8 %v435
    %v437 = vlaneseq
    %v438 = vshrl.u32 %v437, 7
    %v439 = vsub.s32 %v436, %v438
    %v440 = vrot.slane %v432, %v439
    %v442 = vunpack.c.l.s4 1966171168
    %v443 = vunpack.c.0.s8 %v442
    %v444 = vlaneseq
    %v445 = vshrl.u32 %v444, 7
    %v446 = vsub.s32 %v443, %v445
    %v447 = vrot.slane %v433, %v446
    %v448 = vcombine.low %v440, %v447
    %v450 = vunpack.c.l.s4 1966171168
    %v451 = vunpack.c.0.s8 %v450
    %v452 = vlaneseq
    %v453 = vshrl.u32 %v452, 7
    %v454 = vsub.s32 %v451, %v453
    %v455 = vrot.slane %v448, %v454
    %s457 = scalar_lea.vmem [#allocation15], 1
    %458 = vst.msk [vmem:[%s457] ss:$8 sm:$0xf] %vm397, %v455
    %459 = vst.msk [vmem:[%s457] ss:$8 sm:$0x0] %vm397, %v455
    %v460 = vmul.f32 %v277, %v165
    %v461 = vmul.f32 %v278, %v166
    %v462 = vmul.f32 %v279, %v167
    %v463 = vmul.f32 %v280, %v168
    %v464 = vmul.f32 %v281, %v169
    %v465 = vmul.f32 %v282, %v170
    %v466 = vmul.f32 %v283, %v171
    %v467 = vmul.f32 %v284, %v172
    %v468 = vadd.f32 %v460, %v464
    %v469 = vrot.slane %v468, 4
    %v470 = vadd.f32 %v468, %v469
    %v471 = vrot.slane %v470, 2
    %v472 = vadd.f32 %v470, %v471
    %v473 = vrot.slane %v472, 1
    %v474 = vadd.f32 %v472, %v473
    %v475 = vadd.f32 %v461, %v465
    %v476 = vrot.slane %v475, 4
    %v477 = vadd.f32 %v475, %v476
    %v478 = vrot.slane %v477, 2
    %v479 = vadd.f32 %v477, %v478
    %v480 = vrot.slane %v479, 1
    %v481 = vadd.f32 %v479, %v480
    %v482 = vadd.f32 %v462, %v466
    %v483 = vrot.slane %v482, 4
    %v484 = vadd.f32 %v482, %v483
    %v485 = vrot.slane %v484, 2
    %v486 = vadd.f32 %v484, %v485
    %v487 = vrot.slane %v486, 1
    %v488 = vadd.f32 %v486, %v487
    %v489 = vadd.f32 %v463, %v467
    %v490 = vrot.slane %v489, 4
    %v491 = vadd.f32 %v489, %v490
    %v492 = vrot.slane %v491, 2
    %v493 = vadd.f32 %v491, %v492
    %v494 = vrot.slane %v493, 1
    %v495 = vadd.f32 %v493, %v494
    %v500 = vcombine.low %v474, %v481
    %v501 = vcombine.low %v488, %v495
    %v503 = vunpack.c.l.s4 1966171168
    %v504 = vunpack.c.0.s8 %v503
    %v505 = vlaneseq
    %v506 = vshrl.u32 %v505, 7
    %v507 = vsub.s32 %v504, %v506
    %v508 = vrot.slane %v500, %v507
    %v510 = vunpack.c.l.s4 1966171168
    %v511 = vunpack.c.0.s8 %v510
    %v512 = vlaneseq
    %v513 = vshrl.u32 %v512, 7
    %v514 = vsub.s32 %v511, %v513
    %v515 = vrot.slane %v501, %v514
    %v516 = vcombine.low %v508, %v515
    %v518 = vunpack.c.l.s4 1966171168
    %v519 = vunpack.c.0.s8 %v518
    %v520 = vlaneseq
    %v521 = vshrl.u32 %v520, 7
    %v522 = vsub.s32 %v519, %v521
    %v523 = vrot.slane %v516, %v522
    %s525 = scalar_lea.vmem [#allocation15], 2
    %526 = vst.msk [vmem:[%s525] ss:$8 sm:$0xf] %vm397, %v523
    %527 = vst.msk [vmem:[%s525] ss:$8 sm:$0x0] %vm397, %v523
    %v528 = vsub.f32 %v301, %v309
    %v529 = vsub.f32 %v302, %v310
    %v530 = vsub.f32 %v303, %v311
    %v531 = vsub.f32 %v304, %v312
    %v532 = vsub.f32 %v305, %v313
    %v533 = vsub.f32 %v306, %v314
    %v534 = vsub.f32 %v307, %v315
    %v535 = vsub.f32 %v308, %v316
    %v536 = vand.u32 2147483647, %v528
    %v537 = vand.u32 2147483647, %v529
    %v538 = vand.u32 2147483647, %v530
    %v539 = vand.u32 2147483647, %v531
    %v540 = vand.u32 2147483647, %v532
    %v541 = vand.u32 2147483647, %v533
    %v542 = vand.u32 2147483647, %v534
    %v543 = vand.u32 2147483647, %v535
    %v544 = vmul.f32 %v536, %v321
    %v545 = vmul.f32 %v537, %v322
    %v546 = vmul.f32 %v538, %v323
    %v547 = vmul.f32 %v539, %v324
    %v548 = vmul.f32 %v540, %v325
    %v549 = vmul.f32 %v541, %v326
    %v550 = vmul.f32 %v542, %v327
    %v551 = vmul.f32 %v543, %v328
    %v552 = vadd.f32 %v544, %v548
    %v553 = vrot.slane %v552, 4
    %v554 = vadd.f32 %v552, %v553
    %v555 = vrot.slane %v554, 2
    %v556 = vadd.f32 %v554, %v555
    %v557 = vrot.slane %v556, 1
    %v558 = vadd.f32 %v556, %v557
    %v559 = vadd.f32 %v545, %v549
    %v560 = vrot.slane %v559, 4
    %v561 = vadd.f32 %v559, %v560
    %v562 = vrot.slane %v561, 2
    %v563 = vadd.f32 %v561, %v562
    %v564 = vrot.slane %v563, 1
    %v565 = vadd.f32 %v563, %v564
    %v566 = vadd.f32 %v546, %v550
    %v567 = vrot.slane %v566, 4
    %v568 = vadd.f32 %v566, %v567
    %v569 = vrot.slane %v568, 2
    %v570 = vadd.f32 %v568, %v569
    %v571 = vrot.slane %v570, 1
    %v572 = vadd.f32 %v570, %v571
    %v573 = vadd.f32 %v547, %v551
    %v574 = vrot.slane %v573, 4
    %v575 = vadd.f32 %v573, %v574
    %v576 = vrot.slane %v575, 2
    %v577 = vadd.f32 %v575, %v576
    %v578 = vrot.slane %v577, 1
    %v579 = vadd.f32 %v577, %v578
    %v584 = vcombine.low %v558, %v565
    %v585 = vcombine.low %v572, %v579
    %v587 = vunpack.c.l.s4 1966171168
    %v588 = vunpack.c.0.s8 %v587
    %v589 = vlaneseq
    %v590 = vshrl.u32 %v589, 7
    %v591 = vsub.s32 %v588, %v590
    %v592 = vrot.slane %v584, %v591
    %v594 = vunpack.c.l.s4 1966171168
    %v595 = vunpack.c.0.s8 %v594
    %v596 = vlaneseq
    %v597 = vshrl.u32 %v596, 7
    %v598 = vsub.s32 %v595, %v597
    %v599 = vrot.slane %v585, %v598
    %v600 = vcombine.low %v592, %v599
    %v602 = vunpack.c.l.s4 1966171168
    %v603 = vunpack.c.0.s8 %v602
    %v604 = vlaneseq
    %v605 = vshrl.u32 %v604, 7
    %v606 = vsub.s32 %v603, %v605
    %v607 = vrot.slane %v600, %v606
    %s609 = scalar_lea.vmem [#allocation15], 3
    %610 = vst.msk [vmem:[%s609] ss:$8 sm:$0xf] %vm397, %v607
    %611 = vst.msk [vmem:[%s609] ss:$8 sm:$0x0] %vm397, %v607
    %v612 = vadd.f32 %v321, %v325
    %v613 = vrot.slane %v612, 4
    %v614 = vadd.f32 %v612, %v613
    %v615 = vrot.slane %v614, 2
    %v616 = vadd.f32 %v614, %v615
    %v617 = vrot.slane %v616, 1
    %v618 = vadd.f32 %v616, %v617
    %v619 = vadd.f32 %v322, %v326
    %v620 = vrot.slane %v619, 4
    %v621 = vadd.f32 %v619, %v620
    %v622 = vrot.slane %v621, 2
    %v623 = vadd.f32 %v621, %v622
    %v624 = vrot.slane %v623, 1
    %v625 = vadd.f32 %v623, %v624
    %v626 = vadd.f32 %v323, %v327
    %v627 = vrot.slane %v626, 4
    %v628 = vadd.f32 %v626, %v627
    %v629 = vrot.slane %v628, 2
    %v630 = vadd.f32 %v628, %v629
    %v631 = vrot.slane %v630, 1
    %v632 = vadd.f32 %v630, %v631
    %v633 = vadd.f32 %v324, %v328
    %v634 = vrot.slane %v633, 4
    %v635 = vadd.f32 %v633, %v634
    %v636 = vrot.slane %v635, 2
    %v637 = vadd.f32 %v635, %v636
    %v638 = vrot.slane %v637, 1
    %v639 = vadd.f32 %v637, %v638
    %v644 = vcombine.low %v618, %v625
    %v645 = vcombine.low %v632, %v639
    %v647 = vunpack.c.l.s4 1966171168
    %v648 = vunpack.c.0.s8 %v647
    %v649 = vlaneseq
    %v650 = vshrl.u32 %v649, 7
    %v651 = vsub.s32 %v648, %v650
    %v652 = vrot.slane %v644, %v651
    %v654 = vunpack.c.l.s4 1966171168
    %v655 = vunpack.c.0.s8 %v654
    %v656 = vlaneseq
    %v657 = vshrl.u32 %v656, 7
    %v658 = vsub.s32 %v655, %v657
    %v659 = vrot.slane %v645, %v658
    %v660 = vcombine.low %v652, %v659
    %v662 = vunpack.c.l.s4 1966171168
    %v663 = vunpack.c.0.s8 %v662
    %v664 = vlaneseq
    %v665 = vshrl.u32 %v664, 7
    %v666 = vsub.s32 %v663, %v665
    %v667 = vrot.slane %v660, %v666
    %s669 = scalar_lea.vmem [#allocation15], 4
    %670 = vst.msk [vmem:[%s669] ss:$8 sm:$0xf] %vm397, %v667
    %671 = vst.msk [vmem:[%s669] ss:$8 sm:$0x0] %vm397, %v667
    %v672 = vmul.f32 %v329, %v157
    %v673 = vmul.f32 %v330, %v158
    %v674 = vmul.f32 %v331, %v159
    %v675 = vmul.f32 %v332, %v160
    %v676 = vmul.f32 %v333, %v161
    %v677 = vmul.f32 %v334, %v162
    %v678 = vmul.f32 %v335, %v163
    %v679 = vmul.f32 %v336, %v164
    %v680 = vadd.f32 %v672, %v676
    %v681 = vrot.slane %v680, 4
    %v682 = vadd.f32 %v680, %v681
    %v683 = vrot.slane %v682, 2
    %v684 = vadd.f32 %v682, %v683
    %v685 = vrot.slane %v684, 1
    %v686 = vadd.f32 %v684, %v685
    %v687 = vadd.f32 %v673, %v677
    %v688 = vrot.slane %v687, 4
    %v689 = vadd.f32 %v687, %v688
    %v690 = vrot.slane %v689, 2
    %v691 = vadd.f32 %v689, %v690
    %v692 = vrot.slane %v691, 1
    %v693 = vadd.f32 %v691, %v692
    %v694 = vadd.f32 %v674, %v678
    %v695 = vrot.slane %v694, 4
    %v696 = vadd.f32 %v694, %v695
    %v697 = vrot.slane %v696, 2
    %v698 = vadd.f32 %v696, %v697
    %v699 = vrot.slane %v698, 1
    %v700 = vadd.f32 %v698, %v699
    %v701 = vadd.f32 %v675, %v679
    %v702 = vrot.slane %v701, 4
    %v703 = vadd.f32 %v701, %v702
    %v704 = vrot.slane %v703, 2
    %v705 = vadd.f32 %v703, %v704
    %v706 = vrot.slane %v705, 1
    %v707 = vadd.f32 %v705, %v706
    %v712 = vcombine.low %v686, %v693
    %v713 = vcombine.low %v700, %v707
    %v715 = vunpack.c.l.s4 1966171168
    %v716 = vunpack.c.0.s8 %v715
    %v717 = vlaneseq
    %v718 = vshrl.u32 %v717, 7
    %v719 = vsub.s32 %v716, %v718
    %v720 = vrot.slane %v712, %v719
    %v722 = vunpack.c.l.s4 1966171168
    %v723 = vunpack.c.0.s8 %v722
    %v724 = vlaneseq
    %v725 = vshrl.u32 %v724, 7
    %v726 = vsub.s32 %v723, %v725
    %v727 = vrot.slane %v713, %v726
    %v728 = vcombine.low %v720, %v727
    %v730 = vunpack.c.l.s4 1966171168
    %v731 = vunpack.c.0.s8 %v730
    %v732 = vlaneseq
    %v733 = vshrl.u32 %v732, 7
    %v734 = vsub.s32 %v731, %v733
    %v735 = vrot.slane %v728, %v734
    %s737 = scalar_lea.vmem [#allocation15], 5
    %738 = vst.msk [vmem:[%s737] ss:$8 sm:$0xf] %vm397, %v735
    %739 = vst.msk [vmem:[%s737] ss:$8 sm:$0x0] %vm397, %v735
    %v740 = vmul.f32 %v329, %v149
    %v741 = vmul.f32 %v330, %v150
    %v742 = vmul.f32 %v331, %v151
    %v743 = vmul.f32 %v332, %v152
    %v744 = vmul.f32 %v333, %v153
    %v745 = vmul.f32 %v334, %v154
    %v746 = vmul.f32 %v335, %v155
    %v747 = vmul.f32 %v336, %v156
    %v748 = vadd.f32 %v740, %v744
    %v749 = vrot.slane %v748, 4
    %v750 = vadd.f32 %v748, %v749
    %v751 = vrot.slane %v750, 2
    %v752 = vadd.f32 %v750, %v751
    %v753 = vrot.slane %v752, 1
    %v754 = vadd.f32 %v752, %v753
    %v755 = vadd.f32 %v741, %v745
    %v756 = vrot.slane %v755, 4
    %v757 = vadd.f32 %v755, %v756
    %v758 = vrot.slane %v757, 2
    %v759 = vadd.f32 %v757, %v758
    %v760 = vrot.slane %v759, 1
    %v761 = vadd.f32 %v759, %v760
    %v762 = vadd.f32 %v742, %v746
    %v763 = vrot.slane %v762, 4
    %v764 = vadd.f32 %v762, %v763
    %v765 = vrot.slane %v764, 2
    %v766 = vadd.f32 %v764, %v765
    %v767 = vrot.slane %v766, 1
    %v768 = vadd.f32 %v766, %v767
    %v769 = vadd.f32 %v743, %v747
    %v770 = vrot.slane %v769, 4
    %v771 = vadd.f32 %v769, %v770
    %v772 = vrot.slane %v771, 2
    %v773 = vadd.f32 %v771, %v772
    %v774 = vrot.slane %v773, 1
    %v775 = vadd.f32 %v773, %v774
    %v780 = vcombine.low %v754, %v761
    %v781 = vcombine.low %v768, %v775
    %v783 = vunpack.c.l.s4 1966171168
    %v784 = vunpack.c.0.s8 %v783
    %v785 = vlaneseq
    %v786 = vshrl.u32 %v785, 7
    %v787 = vsub.s32 %v784, %v786
    %v788 = vrot.slane %v780, %v787
    %v790 = vunpack.c.l.s4 1966171168
    %v791 = vunpack.c.0.s8 %v790
    %v792 = vlaneseq
    %v793 = vshrl.u32 %v792, 7
    %v794 = vsub.s32 %v791, %v793
    %v795 = vrot.slane %v781, %v794
    %v796 = vcombine.low %v788, %v795
    %v798 = vunpack.c.l.s4 1966171168
    %v799 = vunpack.c.0.s8 %v798
    %v800 = vlaneseq
    %v801 = vshrl.u32 %v800, 7
    %v802 = vsub.s32 %v799, %v801
    %v803 = vrot.slane %v796, %v802
    %s805 = scalar_lea.vmem [#allocation15], 6
    %806 = vst.msk [vmem:[%s805] ss:$8 sm:$0xf] %vm397, %v803
    %807 = vst.msk [vmem:[%s805] ss:$8 sm:$0x0] %vm397, %v803
    %v808 = vadd.f32 %v157, %v161
    %v809 = vrot.slane %v808, 4
    %v810 = vadd.f32 %v808, %v809
    %v811 = vrot.slane %v810, 2
    %v812 = vadd.f32 %v810, %v811
    %v813 = vrot.slane %v812, 1
    %v814 = vadd.f32 %v812, %v813
    %v815 = vadd.f32 %v158, %v162
    %v816 = vrot.slane %v815, 4
    %v817 = vadd.f32 %v815, %v816
    %v818 = vrot.slane %v817, 2
    %v819 = vadd.f32 %v817, %v818
    %v820 = vrot.slane %v819, 1
    %v821 = vadd.f32 %v819, %v820
    %v822 = vadd.f32 %v159, %v163
    %v823 = vrot.slane %v822, 4
    %v824 = vadd.f32 %v822, %v823
    %v825 = vrot.slane %v824, 2
    %v826 = vadd.f32 %v824, %v825
    %v827 = vrot.slane %v826, 1
    %v828 = vadd.f32 %v826, %v827
    %v829 = vadd.f32 %v160, %v164
    %v830 = vrot.slane %v829, 4
    %v831 = vadd.f32 %v829, %v830
    %v832 = vrot.slane %v831, 2
    %v833 = vadd.f32 %v831, %v832
    %v834 = vrot.slane %v833, 1
    %v835 = vadd.f32 %v833, %v834
    %v840 = vcombine.low %v814, %v821
    %v841 = vcombine.low %v828, %v835
    %v843 = vunpack.c.l.s4 1966171168
    %v844 = vunpack.c.0.s8 %v843
    %v845 = vlaneseq
    %v846 = vshrl.u32 %v845, 7
    %v847 = vsub.s32 %v844, %v846
    %v848 = vrot.slane %v840, %v847
    %v850 = vunpack.c.l.s4 1966171168
    %v851 = vunpack.c.0.s8 %v850
    %v852 = vlaneseq
    %v853 = vshrl.u32 %v852, 7
    %v854 = vsub.s32 %v851, %v853
    %v855 = vrot.slane %v841, %v854
    %v856 = vcombine.low %v848, %v855
    %v858 = vunpack.c.l.s4 1966171168
    %v859 = vunpack.c.0.s8 %v858
    %v860 = vlaneseq
    %v861 = vshrl.u32 %v860, 7
    %v862 = vsub.s32 %v859, %v861
    %v863 = vrot.slane %v856, %v862
    %s865 = scalar_lea.vmem [#allocation15], 7
    %866 = vst.msk [vmem:[%s865] ss:$8 sm:$0xf] %vm397, %v863
    %867 = vst.msk [vmem:[%s865] ss:$8 sm:$0x0] %vm397, %v863
    // Predicated region
    $region58: #{tpu_custom_call.1} parent=1 // pred_check
      _
    $region59: #{tpu_custom_call.1} parent=1 // pred_check_branch
      %869 = sbr.rel (0) target = $region61
    $region60: #{tpu_custom_call.1} parent=1 // pred_region
      %s871 = ssub.s32 1024, 1024
      %872 = vsyncadd [#allocation4], %s871
      %s873 = sshll.u32 [#allocation14], 4
      %s874 = int_to_ptr.vmem [resolvable:$true] %s873
      %879 = dma.vmem_to_hbm [thread:$0]  %s874, 1024, %s7, [#allocation4], 512, 512, 32
    $region61: #{tpu_custom_call.1} parent=1 // pred_fallthru
      _
    // Predicated region
    $region62: #{tpu_custom_call.1} parent=1 // pred_check
      _
    $region63: #{tpu_custom_call.1} parent=1 // pred_check_branch
      %881 = sbr.rel (0) target = $region65
    $region64: #{tpu_custom_call.1} parent=1 // pred_region
      %s883 = ssub.s32 512, 512
      %884 = vsyncadd [#allocation16], %s883
      %s886 = sshll.u32 [#allocation15], 4
      %s887 = int_to_ptr.vmem [resolvable:$true] %s886
      %889 = dma.vmem_to_hbm [thread:$0]  %s887, 512, %s8, [#allocation16]
    $region65: #{tpu_custom_call.1} parent=1 // pred_fallthru
      _
    // Predicated region
    $region66: #{tpu_custom_call.1} parent=1 // pred_check
      _
    $region67: #{tpu_custom_call.1} parent=1 // pred_check_branch
      %891 = sbr.rel (0) target = $region69
    $region68: #{tpu_custom_call.1} parent=1 // pred_region
      %892 = dma.done [#allocation4], 1024
    $region69: #{tpu_custom_call.1} parent=1 // pred_fallthru
      _
    // Predicated region
    $region70: #{tpu_custom_call.1} parent=1 // pred_check
      _
    $region71: #{tpu_custom_call.1} parent=1 // pred_check_branch
      %894 = sbr.rel (0) target = $region73
    $region72: #{tpu_custom_call.1} parent=1 // pred_region
      %895 = dma.done [#allocation16], 512
    $region73: #{tpu_custom_call.1} parent=1 // pred_fallthru
      _
    %896 = vsyncpa [#allocation3], 1
    %897 = vsyncpa [#allocation6], 1
    %898 = vsyncpa [#allocation9], 1
    %899 = vsyncpa [#allocation12], 1
    %900 = vsyncpa [#allocation4], 1
    %901 = vsyncpa [#allocation16], 1

</llo_original>
